<compile_context>
chip_gen: v5e
topology: v5e:2x2
jax: 0.10.0
libtpu: 0.0.40
codegen_flags: <defaults>
</compile_context>

<pallas_src>
import functools

import jax
import jax.numpy as jnp
from jax.experimental import pallas as pl
from jax.experimental.pallas import tpu as pltpu


D_IN = 62
D_H1 = 512
D_H2 = 256


def _cdiv(a, b):
    return (a + b - 1) // b


def _round_up(x, m):
    return _cdiv(x, m) * m


def _disc_kernel(x_ref, w1_ref, b1_ref, w2_ref, b2_ref, w3_ref, b3_ref, o_ref):
    # x_ref: (tm, 62) f32; w1: (62, 512) bf16; w2: (512, 256) bf16;
    # b1/b2/w3: (1, N) f32; b3: (1, 1) f32 in SMEM; o_ref: (tm, 1) f32.

    # Linear(62 -> 512) + ReLU.  Cast to bf16 only at the MXU boundary; the
    # unaligned K=62 contraction is zero-padded internally by Mosaic (inert).
    h1 = jnp.dot(x_ref[...].astype(jnp.bfloat16), w1_ref[...],
                 preferred_element_type=jnp.float32)
    h1 = jnp.maximum(h1 + b1_ref[...], 0.0)

    # Linear(512 -> 256) + ReLU.
    h2 = jnp.dot(h1.astype(jnp.bfloat16), w2_ref[...],
                 preferred_element_type=jnp.float32)
    h2 = jnp.maximum(h2 + b2_ref[...], 0.0)

    # Linear(256 -> 1): VPU broadcast-multiply + XLU lane reduction.  Produces
    # the packed (tm, 1) logit column directly; MXU is not the bottleneck, and
    # this removes the padded W3 / padded output entirely.  Stays in f32.
    logit = jnp.sum(h2 * w3_ref[...], axis=-1, keepdims=True) + b3_ref[0, 0]

    # sigmoid(z) = 1 / (1 + exp(-z)); exp and approx reciprocal both run on the
    # otherwise-idle EUP slot instead of a VALU Newton-refined divide.
    o_ref[...] = pl.reciprocal(1.0 + jnp.exp(-logit), approx=True)


def prepare_params(params):
    """One-time layout prep (bf16 casts / reshapes).  Keep OUT of the per-call path."""
    w1, b1, w2, b2, w3, b3 = params
    return (
        w1.astype(jnp.bfloat16),                   # (62, 512)
        b1.reshape(1, D_H1).astype(jnp.float32),   # (1, 512)
        w2.astype(jnp.bfloat16),                   # (512, 256)
        b2.reshape(1, D_H2).astype(jnp.float32),   # (1, 256)
        w3.reshape(1, D_H2).astype(jnp.float32),   # (1, 256) row: layer-3 weights
        b3.reshape(1, 1).astype(jnp.float32),      # (1, 1) scalar, lives in SMEM
    )


@functools.partial(jax.jit, static_argnames=("block_m",))
def discriminator_forward(x, prep_params, *, block_m=2048):
    """x: (B, 62) float32; prep_params from prepare_params().  Returns (B, 1) f32."""
    w1, b1, w2, b2, w3, b3 = prep_params
    B = x.shape[0]

    # Balanced batch tiling: tm = ceil(B / n_tiles) rounded up to 8, so the
    # ragged tail of the final tile wastes < 8 rows (Pallas masks OOB rows).
    # Split a single huge tile in two so both v7x TensorCores get work.
    n_tiles = _cdiv(B, block_m)
    if n_tiles == 1 and B >= 1024:
        n_tiles = 2
    tm = max(8, _round_up(_cdiv(B, n_tiles), 8))
    grid = (_cdiv(B, tm),)

    flops = 2 * B * (D_IN * D_H1 + D_H1 * D_H2 + D_H2)
    bytes_accessed = (B * D_IN * 4                        # x (f32)
                      + (D_IN * D_H1 + D_H1 * D_H2) * 2   # bf16 weights
                      + (D_H1 + 2 * D_H2 + 1) * 4         # biases + w3 row
                      + B * 4)                            # packed output

    out = pl.pallas_call(
        _disc_kernel,
        out_shape=jax.ShapeDtypeStruct((B, 1), jnp.float32),
        grid=grid,
        in_specs=[
            # Batch-tiled activation stream; last dim 62 == full array dim, so
            # no wrapper-side padding is needed.  (If DMA ever becomes exposed
            # at very large tm, add pipeline_mode=pl.Buffered(3) here.)
            pl.BlockSpec((tm, D_IN), lambda i: (i, 0)),
            # Weights / biases: constant block index -> fetched once, VMEM-resident.
            pl.BlockSpec((D_IN, D_H1), lambda i: (0, 0)),
            pl.BlockSpec((1, D_H1), lambda i: (0, 0)),
            pl.BlockSpec((D_H1, D_H2), lambda i: (0, 0)),
            pl.BlockSpec((1, D_H2), lambda i: (0, 0)),
            pl.BlockSpec((1, D_H2), lambda i: (0, 0)),
            # Final bias: a single scalar, lives in SMEM.
            pl.BlockSpec(memory_space=pltpu.MemorySpace.SMEM),
        ],
        # Packed, real-logit-only output column per tile.
        out_specs=pl.BlockSpec((tm, 1), lambda i: (i, 0)),
        compiler_params=pltpu.CompilerParams(
            # Batch tiles are independent -> shard across TensorCores on v7x.
            dimension_semantics=("parallel",),
            # Explicit scoped-VMEM budget: needed for big tiles on v5e (16 MiB
            # default), comfortably under v7x's 64 MiB physical VMEM.
            vmem_limit_bytes=40 * 1024 * 1024,
        ),
        cost_estimate=pl.CostEstimate(
            flops=flops, transcendentals=B, bytes_accessed=bytes_accessed),
    )(x, w1, b1, w2, b2, w3, b3)

    return out


def init_params(key):
    """Deterministic synthetic init matching nn.Linear shapes (stored as (in, out))."""
    k1, k2, k3, k4, k5, k6 = jax.random.split(key, 6)

    def lin(kw, kb, fan_in, fan_out):
        bound = 1.0 / jnp.sqrt(fan_in)
        w = jax.random.uniform(kw, (fan_in, fan_out), jnp.float32, -bound, bound)
        b = jax.random.uniform(kb, (1, fan_out), jnp.float32, -bound, bound)
        return w, b

    w1, b1 = lin(k1, k2, 62, 512)
    w2, b2 = lin(k3, k4, 512, 256)
    w3, b3 = lin(k5, k6, 256, 1)
    return (w1, b1, w2, b2, w3, b3)


def reference_forward(x, params):
    w1, b1, w2, b2, w3, b3 = params
    h1 = jnp.maximum(x @ w1 + b1, 0.0)
    h2 = jnp.maximum(h1 @ w2 + b2, 0.0)
    return jax.nn.sigmoid(h2 @ w3 + b3)


if __name__ == "__main__":
    key = jax.random.PRNGKey(0)
    kx, kp = jax.random.split(key)
    params = init_params(kp)
    prep = prepare_params(params)   # one-time weight prep, outside the call path

    # Small smoke test: single tile, grid=(1,).
    x_small = jax.random.normal(kx, (8, 62), jnp.float32)
    out_small = jax.block_until_ready(discriminator_forward(x_small, prep))
    ref_small = reference_forward(x_small, params)
    assert out_small.shape == (8, 1)
    assert jnp.max(jnp.abs(out_small - ref_small)) < 2e-2  # bf16 MXU tolerance

    # Non-multiple batch with a small block_m: 3 tiles of 104 rows, ragged
    # (masked) tail — exercises batch tiling, weight residency, and OOB masking.
    x_big = jax.random.normal(kx, (300, 62), jnp.float32)
    out_big = jax.block_until_ready(
        discriminator_forward(x_big, prep, block_m=128))
    ref_big = reference_forward(x_big, params)
    assert out_big.shape == (300, 1)
    assert jnp.max(jnp.abs(out_big - ref_big)) < 2e-2

    print("KERNEL_OK")
</pallas_src>

<mosaic_0001>
module attributes {stable_mosaic.version = 11 : i64} {
  func.func @_disc_kernel(%arg0: i32, %arg1: memref<8x62xf32, #tpu.memory_space<vmem>>, %arg2: memref<62x512xbf16, #tpu.memory_space<vmem>>, %arg3: memref<1x512xf32, #tpu.memory_space<vmem>>, %arg4: memref<512x256xbf16, #tpu.memory_space<vmem>>, %arg5: memref<1x256xf32, #tpu.memory_space<vmem>>, %arg6: memref<1x256xf32, #tpu.memory_space<vmem>>, %arg7: memref<1x1xf32, #tpu.memory_space<smem>>, %arg8: memref<8x1xf32, #tpu.memory_space<vmem>>) attributes {dimension_semantics = [#tpu.dimension_semantics<parallel>], iteration_bounds = array<i64: 1>, scalar_prefetch = 0 : i64, scratch_operands = 0 : i64, tpu.core_type = #tpu.core_type<tc>, window_params = [{transform_indices = @transform_0, window_bounds = array<i64: 8, 62>}, {pipeline_mode = #tpu.pipeline_mode<synchronous>, transform_indices = @transform_1, window_bounds = array<i64: 62, 512>}, {pipeline_mode = #tpu.pipeline_mode<synchronous>, transform_indices = @transform_2, window_bounds = array<i64: 1, 512>}, {pipeline_mode = #tpu.pipeline_mode<synchronous>, transform_indices = @transform_3, window_bounds = array<i64: 512, 256>}, {pipeline_mode = #tpu.pipeline_mode<synchronous>, transform_indices = @transform_4, window_bounds = array<i64: 1, 256>}, {pipeline_mode = #tpu.pipeline_mode<synchronous>, transform_indices = @transform_5, window_bounds = array<i64: 1, 256>}, {transform_indices = @transform_6, window_bounds = array<i64: 1, 1>}, {transform_indices = @transform_7, window_bounds = array<i64: 8, 1>}]} {
    %c0 = arith.constant 0 : index
    %c0_0 = arith.constant 0 : index
    %0 = vector.load %arg1[%c0, %c0_0] : memref<8x62xf32, #tpu.memory_space<vmem>>, vector<8x62xf32>
    %1 = arith.truncf %0 : vector<8x62xf32> to vector<8x62xbf16>
    %c0_1 = arith.constant 0 : index
    %c0_2 = arith.constant 0 : index
    %2 = vector.load %arg2[%c0_1, %c0_2] : memref<62x512xbf16, #tpu.memory_space<vmem>>, vector<62x512xbf16>
    %cst = arith.constant dense<0.000000e+00> : vector<8x512xf32>
    %3 = tpu.matmul %1, %2, %cst {dimension_numbers = #tpu.dot_dimension_numbers<[1], [0], [0], [1], [0, 0, 1, 1], [], []>} : vector<8x62xbf16>, vector<62x512xbf16>, vector<8x512xf32> -> vector<8x512xf32>
    %c0_3 = arith.constant 0 : index
    %c0_4 = arith.constant 0 : index
    %4 = vector.load %arg3[%c0_3, %c0_4] : memref<1x512xf32, #tpu.memory_space<vmem>>, vector<1x512xf32>
    %5 = vector.broadcast %4 : vector<1x512xf32> to vector<8x512xf32>
    %6 = arith.addf %3, %5 : vector<8x512xf32>
    %cst_5 = arith.constant 0.000000e+00 : f32
    %7 = vector.broadcast %cst_5 : f32 to vector<8x512xf32>
    %8 = arith.maximumf %6, %7 : vector<8x512xf32>
    %9 = arith.truncf %8 : vector<8x512xf32> to vector<8x512xbf16>
    %c0_6 = arith.constant 0 : index
    %c0_7 = arith.constant 0 : index
    %10 = vector.load %arg4[%c0_6, %c0_7] : memref<512x256xbf16, #tpu.memory_space<vmem>>, vector<512x256xbf16>
    %cst_8 = arith.constant dense<0.000000e+00> : vector<8x256xf32>
    %11 = tpu.matmul %9, %10, %cst_8 {dimension_numbers = #tpu.dot_dimension_numbers<[1], [0], [0], [1], [0, 0, 1, 1], [], []>} : vector<8x512xbf16>, vector<512x256xbf16>, vector<8x256xf32> -> vector<8x256xf32>
    %c0_9 = arith.constant 0 : index
    %c0_10 = arith.constant 0 : index
    %12 = vector.load %arg5[%c0_9, %c0_10] : memref<1x256xf32, #tpu.memory_space<vmem>>, vector<1x256xf32>
    %13 = vector.broadcast %12 : vector<1x256xf32> to vector<8x256xf32>
    %14 = arith.addf %11, %13 : vector<8x256xf32>
    %cst_11 = arith.constant 0.000000e+00 : f32
    %15 = vector.broadcast %cst_11 : f32 to vector<8x256xf32>
    %16 = arith.maximumf %14, %15 : vector<8x256xf32>
    %c0_12 = arith.constant 0 : index
    %c0_13 = arith.constant 0 : index
    %17 = vector.load %arg6[%c0_12, %c0_13] : memref<1x256xf32, #tpu.memory_space<vmem>>, vector<1x256xf32>
    %18 = vector.broadcast %17 : vector<1x256xf32> to vector<8x256xf32>
    %19 = arith.mulf %16, %18 : vector<8x256xf32>
    %cst_14 = arith.constant dense<0.000000e+00> : vector<8xf32>
    %20 = vector.multi_reduction <add>, %19, %cst_14 [1] : vector<8x256xf32> to vector<8xf32>
    %21 = vector.shape_cast %20 : vector<8xf32> to vector<8x1xf32>
    %c0_15 = arith.constant 0 : index
    %c0_16 = arith.constant 0 : index
    %22 = memref.load %arg7[%c0_15, %c0_16] : memref<1x1xf32, #tpu.memory_space<smem>>
    %23 = vector.broadcast %22 : f32 to vector<8x1xf32>
    %24 = arith.addf %21, %23 : vector<8x1xf32>
    %cst_17 = arith.constant 0.000000e+00 : f32
    %25 = vector.broadcast %cst_17 : f32 to vector<8x1xf32>
    %26 = arith.subf %25, %24 : vector<8x1xf32>
    %27 = math.exp %26 : vector<8x1xf32>
    %cst_18 = arith.constant 1.000000e+00 : f32
    %28 = vector.broadcast %cst_18 : f32 to vector<8x1xf32>
    %29 = arith.addf %28, %27 : vector<8x1xf32>
    %30 = tpu.reciprocal %29 {approx = true} : vector<8x1xf32> -> vector<8x1xf32>
    %c0_19 = arith.constant 0 : index
    %c0_20 = arith.constant 0 : index
    %31 = vector.load %arg8[%c0_19, %c0_20] : memref<8x1xf32, #tpu.memory_space<vmem>>, vector<8x1xf32>
    tpu.vector_store %arg8[%c0_19, %c0_20], %30 {strides = array<i32>} : memref<8x1xf32, #tpu.memory_space<vmem>>, vector<8x1xf32>,
    return
  }
  func.func @transform_0(%arg0: i32) -> (i32, i32) {
    %c0_i32 = arith.constant 0 : i32
    %c0_i32_0 = arith.constant 0 : i32
    return %arg0, %c0_i32 : i32, i32
  }
  func.func @transform_1(%arg0: i32) -> (i32, i32) {
    %c0_i32 = arith.constant 0 : i32
    %c0_i32_0 = arith.constant 0 : i32
    %c0_i32_1 = arith.constant 0 : i32
    return %c0_i32, %c0_i32_0 : i32, i32
  }
  func.func @transform_2(%arg0: i32) -> (i32, i32) {
    %c0_i32 = arith.constant 0 : i32
    %c0_i32_0 = arith.constant 0 : i32
    %c0_i32_1 = arith.constant 0 : i32
    return %c0_i32, %c0_i32_0 : i32, i32
  }
  func.func @transform_3(%arg0: i32) -> (i32, i32) {
    %c0_i32 = arith.constant 0 : i32
    %c0_i32_0 = arith.constant 0 : i32
    %c0_i32_1 = arith.constant 0 : i32
    return %c0_i32, %c0_i32_0 : i32, i32
  }
  func.func @transform_4(%arg0: i32) -> (i32, i32) {
    %c0_i32 = arith.constant 0 : i32
    %c0_i32_0 = arith.constant 0 : i32
    %c0_i32_1 = arith.constant 0 : i32
    return %c0_i32, %c0_i32_0 : i32, i32
  }
  func.func @transform_5(%arg0: i32) -> (i32, i32) {
    %c0_i32 = arith.constant 0 : i32
    %c0_i32_0 = arith.constant 0 : i32
    %c0_i32_1 = arith.constant 0 : i32
    return %c0_i32, %c0_i32_0 : i32, i32
  }
  func.func @transform_6(%arg0: i32) -> (i32, i32) {
    %c0_i32 = arith.constant 0 : i32
    %c0_i32_0 = arith.constant 0 : i32
    %c0_i32_1 = arith.constant 0 : i32
    return %c0_i32, %c0_i32_0 : i32, i32
  }
  func.func @transform_7(%arg0: i32) -> (i32, i32) {
    %c0_i32 = arith.constant 0 : i32
    %c0_i32_0 = arith.constant 0 : i32
    return %arg0, %c0_i32 : i32, i32
  }
}

</mosaic_0001>

<llo_original>
// kernel: discriminator_forward.1
$region0: #{discriminator_forward.1}
  #allocation0 [shape = 'u32[]', space=smem, size = 0x4, offset = 0x4, fixed_abs, tag = 'smem constant byte address 0x4 - core index']
  #allocation1 [shape = 'u32[72,128]{1,0:T(1,128)}', space=vmem, size = 0x9000, scoped, tag = 'internal scratch']
  #allocation2 [shape = 'f32[1,1]{1,0:T(1,128)S(6)}', space=smem, size = 0x200, scoped, tag = 'scoped memory for discriminator_forward.1']
  %s0 = inlined_call_operand.hbm [shape: f32[8,62], index: 0, kind: input, shape index: {}]
  %s1 = inlined_call_operand.hbm [shape: bf16[62,512], index: 1, kind: input, shape index: {}]
  %s2 = inlined_call_operand.hbm [shape: f32[1,512], index: 2, kind: input, shape index: {}]
  %s3 = inlined_call_operand.hbm [shape: bf16[512,256], index: 3, kind: input, shape index: {}]
  %s4 = inlined_call_operand.vmem [shape: f32[1,256], index: 4, kind: input, shape index: {}]
  %s5 = inlined_call_operand.vmem [shape: f32[1,256], index: 5, kind: input, shape index: {}]
  %s6 = inlined_call_operand.<no memory space> [shape: f32[1,1], index: 6, kind: input, shape index: {}]
  %s7 = inlined_call_operand.vmem [shape: f32[8,1], index: 7, kind: output, shape index: {}]
  %s8 = sld [smem:[#allocation0]]
  $region54: #{discriminator_forward.1} parent=0
    _
  %s10 = ssub.s32 1, %s8
  %s11 = scalar_select 0, %s10, %s8
  %12 = sst [smem:[#allocation2]] %s6
  $region1: #{discriminator_forward.1} parent=0
    #allocation3 [shape = 'u8[4096]{0}', space=vmem, size = 0x1000, scoped, tag = 'input window, operand 0, single buffered']
    #allocation4 [shape = 's32[1]{0}', space=sflag, size = 0x4, scoped, tag = 'scoped memory for discriminator_forward.1']
    #allocation5 [shape = 'u8[65536]{0}', space=vmem, size = 0x10000, scoped, tag = 'input window, operand 1, single buffered']
    #allocation6 [shape = 's32[1]{0}', space=sflag, size = 0x4, scoped, tag = 'scoped memory for discriminator_forward.1']
    #allocation7 [shape = 'u8[2048]{0}', space=vmem, size = 0x800, scoped, tag = 'input window, operand 2, single buffered']
    #allocation8 [shape = 'u8[262144]{0}', space=vmem, size = 0x40000, scoped, tag = 'input window, operand 3, single buffered']
    #allocation9 [shape = 's32[1]{0}', space=sflag, size = 0x4, scoped, tag = 'scoped memory for discriminator_forward.1']
    %13 = vsyncpa [#allocation4], 0
    %14 = vsyncpa [#allocation6], 0
    %15 = vsyncpa [#allocation9], 0
    // Predicated region
    $region2: #{discriminator_forward.1} parent=1 // pred_check
      _
    $region3: #{discriminator_forward.1} parent=1 // pred_check_branch
      %17 = sbr.rel (0) target = $region5
    $region4: #{discriminator_forward.1} parent=1 // pred_region
      %19 = vsyncadd [#allocation4], 0
      %s21 = sshll.u32 %s0, 4
      %s22 = int_to_ptr.hbm [resolvable:$true] %s21
      %s23 = sshll.u32 [#allocation3], 4
      %s24 = int_to_ptr.vmem [resolvable:$true] %s23
      %26 = dma.hbm_to_vmem [thread:$0]  %s22, 128, %s24, [#allocation4]
    $region5: #{discriminator_forward.1} parent=1 // pred_fallthru
      _
    // Predicated region
    $region6: #{discriminator_forward.1} parent=1 // pred_check
      _
    $region7: #{discriminator_forward.1} parent=1 // pred_check_branch
      %28 = sbr.rel (0) target = $region9
    $region8: #{discriminator_forward.1} parent=1 // pred_region
      %30 = vsyncadd [#allocation6], 0
      %s31 = sshll.u32 %s1, 4
      %s32 = int_to_ptr.hbm [resolvable:$true] %s31
      %s33 = sshll.u32 [#allocation5], 4
      %s34 = int_to_ptr.vmem [resolvable:$true] %s33
      %39 = dma.hbm_to_vmem [thread:$0]  %s32, 2048, %s34, [#allocation6], 256, 256, 16
    $region9: #{discriminator_forward.1} parent=1 // pred_fallthru
      _
    // Predicated region
    $region10: #{discriminator_forward.1} parent=1 // pred_check
      _
    $region11: #{discriminator_forward.1} parent=1 // pred_check_branch
      %41 = sbr.rel (0) target = $region13
    $region12: #{discriminator_forward.1} parent=1 // pred_region
      %43 = vsyncadd [#allocation6], 0
      %s45 = sshll.u32 %s2, 4
      %s46 = int_to_ptr.hbm [resolvable:$true] %s45
      %s47 = sshll.u32 [#allocation7], 4
      %s48 = int_to_ptr.vmem [resolvable:$true] %s47
      %50 = dma.hbm_to_vmem [thread:$0]  %s46, 64, %s48, [#allocation6]
    $region13: #{discriminator_forward.1} parent=1 // pred_fallthru
      _
    // Predicated region
    $region14: #{discriminator_forward.1} parent=1 // pred_check
      _
    $region15: #{discriminator_forward.1} parent=1 // pred_check_branch
      %52 = sbr.rel (0) target = $region17
    $region16: #{discriminator_forward.1} parent=1 // pred_region
      %54 = vsyncadd [#allocation9], 0
      %s55 = sshll.u32 %s3, 4
      %s56 = int_to_ptr.hbm [resolvable:$true] %s55
      %s57 = sshll.u32 [#allocation8], 4
      %s58 = int_to_ptr.vmem [resolvable:$true] %s57
      %63 = dma.hbm_to_vmem [thread:$0]  %s56, 8192, %s58, [#allocation9], 128, 128, 8
    $region17: #{discriminator_forward.1} parent=1 // pred_fallthru
      _
    // Predicated region
    $region18: #{discriminator_forward.1} parent=1 // pred_check
      _
    $region19: #{discriminator_forward.1} parent=1 // pred_check_branch
      %65 = sbr.rel (0) target = $region21
    $region20: #{discriminator_forward.1} parent=1 // pred_region
      _
    $region21: #{discriminator_forward.1} parent=1 // pred_fallthru
      _
    // Predicated region
    $region22: #{discriminator_forward.1} parent=1 // pred_check
      _
    $region23: #{discriminator_forward.1} parent=1 // pred_check_branch
      %67 = sbr.rel (0) target = $region25
    $region24: #{discriminator_forward.1} parent=1 // pred_region
      _
    $region25: #{discriminator_forward.1} parent=1 // pred_fallthru
      _
    // Predicated region
    $region26: #{discriminator_forward.1} parent=1 // pred_check
      _
    $region27: #{discriminator_forward.1} parent=1 // pred_check_branch
      %69 = sbr.rel (0) target = $region29
    $region28: #{discriminator_forward.1} parent=1 // pred_region
      _
    $region29: #{discriminator_forward.1} parent=1 // pred_fallthru
      _
    // Predicated region
    $region30: #{discriminator_forward.1} parent=1 // pred_check
      _
    $region31: #{discriminator_forward.1} parent=1 // pred_check_branch
      %71 = sbr.rel (0) target = $region33
    $region32: #{discriminator_forward.1} parent=1 // pred_region
      %73 = dma.done [#allocation4], 128
    $region33: #{discriminator_forward.1} parent=1 // pred_fallthru
      _
    // Predicated region
    $region34: #{discriminator_forward.1} parent=1 // pred_check
      _
    $region35: #{discriminator_forward.1} parent=1 // pred_check_branch
      %75 = sbr.rel (0) target = $region37
    $region36: #{discriminator_forward.1} parent=1 // pred_region
      %77 = dma.done [#allocation6], 2048
    $region37: #{discriminator_forward.1} parent=1 // pred_fallthru
      _
    // Predicated region
    $region38: #{discriminator_forward.1} parent=1 // pred_check
      _
    $region39: #{discriminator_forward.1} parent=1 // pred_check_branch
      %79 = sbr.rel (0) target = $region41
    $region40: #{discriminator_forward.1} parent=1 // pred_region
      %81 = dma.done [#allocation6], 64
    $region41: #{discriminator_forward.1} parent=1 // pred_fallthru
      _
    // Predicated region
    $region42: #{discriminator_forward.1} parent=1 // pred_check
      _
    $region43: #{discriminator_forward.1} parent=1 // pred_check_branch
      %83 = sbr.rel (0) target = $region45
    $region44: #{discriminator_forward.1} parent=1 // pred_region
      %85 = dma.done [#allocation9], 8192
    $region45: #{discriminator_forward.1} parent=1 // pred_fallthru
      _
    %v87 = vld [vmem:[#allocation3] sm:$0xff]
    %v88 = vpack.c.bf16 %v87, %v87
    %v89 = vld [vmem:[#allocation5] sm:$0xff]
    %v90 = vld [vmem:[#allocation5 + $0x8] sm:$0xff]
    %v91 = vld [vmem:[#allocation5 + $0x10] sm:$0xff]
    %v92 = vld [vmem:[#allocation5 + $0x18] sm:$0xff]
    %v93 = vld [vmem:[#allocation5 + $0x20] sm:$0xff]
    %v94 = vld [vmem:[#allocation5 + $0x28] sm:$0xff]
    %v95 = vld [vmem:[#allocation5 + $0x30] sm:$0xff]
    %v96 = vld [vmem:[#allocation5 + $0x38] sm:$0xff]
    %v97 = vld [vmem:[#allocation5 + $0x40] sm:$0xff]
    %v98 = vld [vmem:[#allocation5 + $0x48] sm:$0xff]
    %v99 = vld [vmem:[#allocation5 + $0x50] sm:$0xff]
    %v100 = vld [vmem:[#allocation5 + $0x58] sm:$0xff]
    %v101 = vld [vmem:[#allocation5 + $0x60] sm:$0xff]
    %v102 = vld [vmem:[#allocation5 + $0x68] sm:$0xff]
    %v103 = vld [vmem:[#allocation5 + $0x70] sm:$0x77]
    %v104 = vld [vmem:[#allocation5 + $0x78] sm:$0x77]
    %v105 = vld [vmem:[#allocation7] sm:$0xf]
    %v107 = vperm.slane %v105, 0
    %v108 = vperm.slane %v105, 1
    %v109 = vperm.slane %v105, 2
    %v110 = vperm.slane %v105, 3
    %v131 = vunpack.c.l.b16 %v89
    %v132 = vunpack.c.h.b16 %v89
    %v133 = vunpack.c.l.b16 %v90
    %v134 = vunpack.c.h.b16 %v90
    %v135 = vunpack.c.l.b16 %v91
    %v136 = vunpack.c.h.b16 %v91
    %v137 = vunpack.c.l.b16 %v92
    %v138 = vunpack.c.h.b16 %v92
    %v139 = vunpack.c.l.b16 %v93
    %v140 = vunpack.c.h.b16 %v93
    %v141 = vunpack.c.l.b16 %v94
    %v142 = vunpack.c.h.b16 %v94
    %v143 = vunpack.c.l.b16 %v95
    %v144 = vunpack.c.h.b16 %v95
    %v145 = vunpack.c.l.b16 %v96
    %v146 = vunpack.c.h.b16 %v96
    %v147 = vunpack.c.l.b16 %v97
    %v148 = vunpack.c.h.b16 %v97
    %v149 = vunpack.c.l.b16 %v98
    %v150 = vunpack.c.h.b16 %v98
    %v151 = vunpack.c.l.b16 %v99
    %v152 = vunpack.c.h.b16 %v99
    %v153 = vunpack.c.l.b16 %v100
    %v154 = vunpack.c.h.b16 %v100
    %v155 = vunpack.c.l.b16 %v101
    %v156 = vunpack.c.h.b16 %v101
    %v157 = vunpack.c.l.b16 %v102
    %v158 = vunpack.c.h.b16 %v102
    %v159 = vunpack.c.l.b16 %v103
    %v160 = vunpack.c.h.b16 %v103
    %v161 = vunpack.c.l.b16 %v104
    %v162 = vunpack.c.h.b16 %v104
    %v163 = vpack.c.b16 %v135, %v131
    %v164 = vpack.c.b16 %v136, %v132
    %v165 = vpack.c.b16 %v137, %v133
    %v166 = vpack.c.b16 %v138, %v134
    %v167 = vpack.c.b16 %v143, %v139
    %v168 = vpack.c.b16 %v144, %v140
    %v169 = vpack.c.b16 %v145, %v141
    %v170 = vpack.c.b16 %v146, %v142
    %v171 = vpack.c.b16 %v151, %v147
    %v172 = vpack.c.b16 %v152, %v148
    %v173 = vpack.c.b16 %v153, %v149
    %v174 = vpack.c.b16 %v154, %v150
    %v175 = vpack.c.b16 %v159, %v155
    %v176 = vpack.c.b16 %v160, %v156
    %v177 = vpack.c.b16 %v161, %v157
    %v178 = vpack.c.b16 %v162, %v158
    %vm191 = vcmask 506880
    %v193 = vsel %vm191, %v88, 0
    %vm195 = vcmask 1046528
    %v197 = vsel %vm195, %v175, 0
    %v200 = vsel %vm195, %v176, 0
    %v203 = vsel %vm195, %v177, 0
    %v206 = vsel %vm195, %v178, 0
    %208 = vmatpush.bf16.msra.mxu0 0
    %209 = vmatpush.bf16.msra.mxu0 0
    %210 = vmatpush.bf16.msra.mxu0 0
    %211 = vmatpush.bf16.msra.mxu0 0
    %212 = vmatpush.bf16.msra.mxu0 %v197
    %213 = vmatpush.bf16.msra.mxu0 %v171
    %214 = vmatpush.bf16.msra.mxu0 %v167
    %215 = vmatpush.bf16.msra.mxu0 %v163
    %216 = vmatmul.bf16.gmra.mxu0 %v193
    %v217 = vpop.f32.mrf.mxu0
    %v218 = vadd.f32 %v107, %v217
    %v219 = vpop.f32.mrf.mxu0
    %220 = vdwg.mxu0
    %221 = vmatpush.bf16.msra.mxu0 0
    %222 = vmatpush.bf16.msra.mxu0 0
    %223 = vmatpush.bf16.msra.mxu0 0
    %224 = vmatpush.bf16.msra.mxu0 0
    %225 = vmatpush.bf16.msra.mxu0 %v200
    %226 = vmatpush.bf16.msra.mxu0 %v172
    %227 = vmatpush.bf16.msra.mxu0 %v168
    %228 = vmatpush.bf16.msra.mxu0 %v164
    %229 = vmatmul.bf16.gmra.mxu0 %v193
    %v230 = vpop.f32.mrf.mxu0
    %v231 = vadd.f32 %v108, %v230
    %v232 = vpop.f32.mrf.mxu0
    %233 = vdwg.mxu0
    %234 = vmatpush.bf16.msra.mxu0 0
    %235 = vmatpush.bf16.msra.mxu0 0
    %236 = vmatpush.bf16.msra.mxu0 0
    %237 = vmatpush.bf16.msra.mxu0 0
    %238 = vmatpush.bf16.msra.mxu0 %v203
    %239 = vmatpush.bf16.msra.mxu0 %v173
    %240 = vmatpush.bf16.msra.mxu0 %v169
    %241 = vmatpush.bf16.msra.mxu0 %v165
    %242 = vmatmul.bf16.gmra.mxu0 %v193
    %v243 = vpop.f32.mrf.mxu0
    %v244 = vadd.f32 %v109, %v243
    %v245 = vpop.f32.mrf.mxu0
    %246 = vdwg.mxu0
    %247 = vmatpush.bf16.msra.mxu0 0
    %248 = vmatpush.bf16.msra.mxu0 0
    %249 = vmatpush.bf16.msra.mxu0 0
    %250 = vmatpush.bf16.msra.mxu0 0
    %251 = vmatpush.bf16.msra.mxu0 %v206
    %252 = vmatpush.bf16.msra.mxu0 %v174
    %253 = vmatpush.bf16.msra.mxu0 %v170
    %254 = vmatpush.bf16.msra.mxu0 %v166
    %255 = vmatmul.bf16.gmra.mxu0 %v193
    %v256 = vpop.f32.mrf.mxu0
    %v257 = vadd.f32 %v110, %v256
    %v258 = vpop.f32.mrf.mxu0
    %259 = vdwg.mxu0
    %v260 = vmax.f32 %v218, 0.0
    %v261 = vmax.f32 %v231, 0.0
    %v262 = vmax.f32 %v244, 0.0
    %v263 = vmax.f32 %v257, 0.0
    %v264 = vpack.c.bf16 %v260, %v260
    %v265 = vpack.c.bf16 %v261, %v261
    %v266 = vpack.c.bf16 %v262, %v262
    %v267 = vpack.c.bf16 %v263, %v263
    %v268 = vld [vmem:[#allocation8] sm:$0xff]
    %v269 = vld [vmem:[#allocation8 + $0x8] sm:$0xff]
    %v270 = vld [vmem:[#allocation8 + $0x10] sm:$0xff]
    %v271 = vld [vmem:[#allocation8 + $0x18] sm:$0xff]
    %v272 = vld [vmem:[#allocation8 + $0x20] sm:$0xff]
    %v273 = vld [vmem:[#allocation8 + $0x28] sm:$0xff]
    %v274 = vld [vmem:[#allocation8 + $0x30] sm:$0xff]
    %v275 = vld [vmem:[#allocation8 + $0x38] sm:$0xff]
    %v276 = vld [vmem:[#allocation8 + $0x40] sm:$0xff]
    %v277 = vld [vmem:[#allocation8 + $0x48] sm:$0xff]
    %v278 = vld [vmem:[#allocation8 + $0x50] sm:$0xff]
    %v279 = vld [vmem:[#allocation8 + $0x58] sm:$0xff]
    %v280 = vld [vmem:[#allocation8 + $0x60] sm:$0xff]
    %v281 = vld [vmem:[#allocation8 + $0x68] sm:$0xff]
    %v282 = vld [vmem:[#allocation8 + $0x70] sm:$0xff]
    %v283 = vld [vmem:[#allocation8 + $0x78] sm:$0xff]
    %v284 = vld [vmem:[#allocation8 + $0x80] sm:$0xff]
    %v285 = vld [vmem:[#allocation8 + $0x88] sm:$0xff]
    %v286 = vld [vmem:[#allocation8 + $0x90] sm:$0xff]
    %v287 = vld [vmem:[#allocation8 + $0x98] sm:$0xff]
    %v288 = vld [vmem:[#allocation8 + $0xa0] sm:$0xff]
    %v289 = vld [vmem:[#allocation8 + $0xa8] sm:$0xff]
    %v290 = vld [vmem:[#allocation8 + $0xb0] sm:$0xff]
    %v291 = vld [vmem:[#allocation8 + $0xb8] sm:$0xff]
    %v292 = vld [vmem:[#allocation8 + $0xc0] sm:$0xff]
    %v293 = vld [vmem:[#allocation8 + $0xc8] sm:$0xff]
    %v294 = vld [vmem:[#allocation8 + $0xd0] sm:$0xff]
    %v295 = vld [vmem:[#allocation8 + $0xd8] sm:$0xff]
    %v296 = vld [vmem:[#allocation8 + $0xe0] sm:$0xff]
    %v297 = vld [vmem:[#allocation8 + $0xe8] sm:$0xff]
    %v298 = vld [vmem:[#allocation8 + $0xf0] sm:$0xff]
    %v299 = vld [vmem:[#allocation8 + $0xf8] sm:$0xff]
    %v300 = vld [vmem:[#allocation8 + $0x100] sm:$0xff]
    %v301 = vld [vmem:[#allocation8 + $0x108] sm:$0xff]
    %v302 = vld [vmem:[#allocation8 + $0x110] sm:$0xff]
    %v303 = vld [vmem:[#allocation8 + $0x118] sm:$0xff]
    %v304 = vld [vmem:[#allocation8 + $0x120] sm:$0xff]
    %v305 = vld [vmem:[#allocation8 + $0x128] sm:$0xff]
    %v306 = vld [vmem:[#allocation8 + $0x130] sm:$0xff]
    %v307 = vld [vmem:[#allocation8 + $0x138] sm:$0xff]
    %v308 = vld [vmem:[#allocation8 + $0x140] sm:$0xff]
    %v309 = vld [vmem:[#allocation8 + $0x148] sm:$0xff]
    %v310 = vld [vmem:[#allocation8 + $0x150] sm:$0xff]
    %v311 = vld [vmem:[#allocation8 + $0x158] sm:$0xff]
    %v312 = vld [vmem:[#allocation8 + $0x160] sm:$0xff]
    %v313 = vld [vmem:[#allocation8 + $0x168] sm:$0xff]
    %v314 = vld [vmem:[#allocation8 + $0x170] sm:$0xff]
    %v315 = vld [vmem:[#allocation8 + $0x178] sm:$0xff]
    %v316 = vld [vmem:[#allocation8 + $0x180] sm:$0xff]
    %v317 = vld [vmem:[#allocation8 + $0x188] sm:$0xff]
    %v318 = vld [vmem:[#allocation8 + $0x190] sm:$0xff]
    %v319 = vld [vmem:[#allocation8 + $0x198] sm:$0xff]
    %v320 = vld [vmem:[#allocation8 + $0x1a0] sm:$0xff]
    %v321 = vld [vmem:[#allocation8 + $0x1a8] sm:$0xff]
    %v322 = vld [vmem:[#allocation8 + $0x1b0] sm:$0xff]
    %v323 = vld [vmem:[#allocation8 + $0x1b8] sm:$0xff]
    %v324 = vld [vmem:[#allocation8 + $0x1c0] sm:$0xff]
    %v325 = vld [vmem:[#allocation8 + $0x1c8] sm:$0xff]
    %v326 = vld [vmem:[#allocation8 + $0x1d0] sm:$0xff]
    %v327 = vld [vmem:[#allocation8 + $0x1d8] sm:$0xff]
    %v328 = vld [vmem:[#allocation8 + $0x1e0] sm:$0xff]
    %v329 = vld [vmem:[#allocation8 + $0x1e8] sm:$0xff]
    %v330 = vld [vmem:[#allocation8 + $0x1f0] sm:$0xff]
    %v331 = vld [vmem:[#allocation8 + $0x1f8] sm:$0xff]
    %v332 = vld [vmem:[%s4] sm:$0x3]
    %v334 = vperm.slane %v332, 0
    %v335 = vperm.slane %v332, 1
    %v402 = vunpack.c.l.b16 %v268
    %v403 = vunpack.c.h.b16 %v268
    %v404 = vunpack.c.l.b16 %v269
    %v405 = vunpack.c.h.b16 %v269
    %v406 = vunpack.c.l.b16 %v270
    %v407 = vunpack.c.h.b16 %v270
    %v408 = vunpack.c.l.b16 %v271
    %v409 = vunpack.c.h.b16 %v271
    %v410 = vunpack.c.l.b16 %v272
    %v411 = vunpack.c.h.b16 %v272
    %v412 = vunpack.c.l.b16 %v273
    %v413 = vunpack.c.h.b16 %v273
    %v414 = vunpack.c.l.b16 %v274
    %v415 = vunpack.c.h.b16 %v274
    %v416 = vunpack.c.l.b16 %v275
    %v417 = vunpack.c.h.b16 %v275
    %v418 = vunpack.c.l.b16 %v276
    %v419 = vunpack.c.h.b16 %v276
    %v420 = vunpack.c.l.b16 %v277
    %v421 = vunpack.c.h.b16 %v277
    %v422 = vunpack.c.l.b16 %v278
    %v423 = vunpack.c.h.b16 %v278
    %v424 = vunpack.c.l.b16 %v279
    %v425 = vunpack.c.h.b16 %v279
    %v426 = vunpack.c.l.b16 %v280
    %v427 = vunpack.c.h.b16 %v280
    %v428 = vunpack.c.l.b16 %v281
    %v429 = vunpack.c.h.b16 %v281
    %v430 = vunpack.c.l.b16 %v282
    %v431 = vunpack.c.h.b16 %v282
    %v432 = vunpack.c.l.b16 %v283
    %v433 = vunpack.c.h.b16 %v283
    %v434 = vunpack.c.l.b16 %v284
    %v435 = vunpack.c.h.b16 %v284
    %v436 = vunpack.c.l.b16 %v285
    %v437 = vunpack.c.h.b16 %v285
    %v438 = vunpack.c.l.b16 %v286
    %v439 = vunpack.c.h.b16 %v286
    %v440 = vunpack.c.l.b16 %v287
    %v441 = vunpack.c.h.b16 %v287
    %v442 = vunpack.c.l.b16 %v288
    %v443 = vunpack.c.h.b16 %v288
    %v444 = vunpack.c.l.b16 %v289
    %v445 = vunpack.c.h.b16 %v289
    %v446 = vunpack.c.l.b16 %v290
    %v447 = vunpack.c.h.b16 %v290
    %v448 = vunpack.c.l.b16 %v291
    %v449 = vunpack.c.h.b16 %v291
    %v450 = vunpack.c.l.b16 %v292
    %v451 = vunpack.c.h.b16 %v292
    %v452 = vunpack.c.l.b16 %v293
    %v453 = vunpack.c.h.b16 %v293
    %v454 = vunpack.c.l.b16 %v294
    %v455 = vunpack.c.h.b16 %v294
    %v456 = vunpack.c.l.b16 %v295
    %v457 = vunpack.c.h.b16 %v295
    %v458 = vunpack.c.l.b16 %v296
    %v459 = vunpack.c.h.b16 %v296
    %v460 = vunpack.c.l.b16 %v297
    %v461 = vunpack.c.h.b16 %v297
    %v462 = vunpack.c.l.b16 %v298
    %v463 = vunpack.c.h.b16 %v298
    %v464 = vunpack.c.l.b16 %v299
    %v465 = vunpack.c.h.b16 %v299
    %v466 = vunpack.c.l.b16 %v300
    %v467 = vunpack.c.h.b16 %v300
    %v468 = vunpack.c.l.b16 %v301
    %v469 = vunpack.c.h.b16 %v301
    %v470 = vunpack.c.l.b16 %v302
    %v471 = vunpack.c.h.b16 %v302
    %v472 = vunpack.c.l.b16 %v303
    %v473 = vunpack.c.h.b16 %v303
    %v474 = vunpack.c.l.b16 %v304
    %v475 = vunpack.c.h.b16 %v304
    %v476 = vunpack.c.l.b16 %v305
    %v477 = vunpack.c.h.b16 %v305
    %v478 = vunpack.c.l.b16 %v306
    %v479 = vunpack.c.h.b16 %v306
    %v480 = vunpack.c.l.b16 %v307
    %v481 = vunpack.c.h.b16 %v307
    %v482 = vunpack.c.l.b16 %v308
    %v483 = vunpack.c.h.b16 %v308
    %v484 = vunpack.c.l.b16 %v309
    %v485 = vunpack.c.h.b16 %v309
    %v486 = vunpack.c.l.b16 %v310
    %v487 = vunpack.c.h.b16 %v310
    %v488 = vunpack.c.l.b16 %v311
    %v489 = vunpack.c.h.b16 %v311
    %v490 = vunpack.c.l.b16 %v312
    %v491 = vunpack.c.h.b16 %v312
    %v492 = vunpack.c.l.b16 %v313
    %v493 = vunpack.c.h.b16 %v313
    %v494 = vunpack.c.l.b16 %v314
    %v495 = vunpack.c.h.b16 %v314
    %v496 = vunpack.c.l.b16 %v315
    %v497 = vunpack.c.h.b16 %v315
    %v498 = vunpack.c.l.b16 %v316
    %v499 = vunpack.c.h.b16 %v316
    %v500 = vunpack.c.l.b16 %v317
    %v501 = vunpack.c.h.b16 %v317
    %v502 = vunpack.c.l.b16 %v318
    %v503 = vunpack.c.h.b16 %v318
    %v504 = vunpack.c.l.b16 %v319
    %v505 = vunpack.c.h.b16 %v319
    %v506 = vunpack.c.l.b16 %v320
    %v507 = vunpack.c.h.b16 %v320
    %v508 = vunpack.c.l.b16 %v321
    %v509 = vunpack.c.h.b16 %v321
    %v510 = vunpack.c.l.b16 %v322
    %v511 = vunpack.c.h.b16 %v322
    %v512 = vunpack.c.l.b16 %v323
    %v513 = vunpack.c.h.b16 %v323
    %v514 = vunpack.c.l.b16 %v324
    %v515 = vunpack.c.h.b16 %v324
    %v516 = vunpack.c.l.b16 %v325
    %v517 = vunpack.c.h.b16 %v325
    %v518 = vunpack.c.l.b16 %v326
    %v519 = vunpack.c.h.b16 %v326
    %v520 = vunpack.c.l.b16 %v327
    %v521 = vunpack.c.h.b16 %v327
    %v522 = vunpack.c.l.b16 %v328
    %v523 = vunpack.c.h.b16 %v328
    %v524 = vunpack.c.l.b16 %v329
    %v525 = vunpack.c.h.b16 %v329
    %v526 = vunpack.c.l.b16 %v330
    %v527 = vunpack.c.h.b16 %v330
    %v528 = vunpack.c.l.b16 %v331
    %v529 = vunpack.c.h.b16 %v331
    %v530 = vpack.c.b16 %v404, %v402
    %v531 = vpack.c.b16 %v405, %v403
    %v532 = vpack.c.b16 %v408, %v406
    %v533 = vpack.c.b16 %v409, %v407
    %v534 = vpack.c.b16 %v412, %v410
    %v535 = vpack.c.b16 %v413, %v411
    %v536 = vpack.c.b16 %v416, %v414
    %v537 = vpack.c.b16 %v417, %v415
    %v538 = vpack.c.b16 %v420, %v418
    %v539 = vpack.c.b16 %v421, %v419
    %v540 = vpack.c.b16 %v424, %v422
    %v541 = vpack.c.b16 %v425, %v423
    %v542 = vpack.c.b16 %v428, %v426
    %v543 = vpack.c.b16 %v429, %v427
    %v544 = vpack.c.b16 %v432, %v430
    %v545 = vpack.c.b16 %v433, %v431
    %v546 = vpack.c.b16 %v436, %v434
    %v547 = vpack.c.b16 %v437, %v435
    %v548 = vpack.c.b16 %v440, %v438
    %v549 = vpack.c.b16 %v441, %v439
    %v550 = vpack.c.b16 %v444, %v442
    %v551 = vpack.c.b16 %v445, %v443
    %v552 = vpack.c.b16 %v448, %v446
    %v553 = vpack.c.b16 %v449, %v447
    %v554 = vpack.c.b16 %v452, %v450
    %v555 = vpack.c.b16 %v453, %v451
    %v556 = vpack.c.b16 %v456, %v454
    %v557 = vpack.c.b16 %v457, %v455
    %v558 = vpack.c.b16 %v460, %v458
    %v559 = vpack.c.b16 %v461, %v459
    %v560 = vpack.c.b16 %v464, %v462
    %v561 = vpack.c.b16 %v465, %v463
    %v562 = vpack.c.b16 %v468, %v466
    %v563 = vpack.c.b16 %v469, %v467
    %v564 = vpack.c.b16 %v472, %v470
    %v565 = vpack.c.b16 %v473, %v471
    %v566 = vpack.c.b16 %v476, %v474
    %v567 = vpack.c.b16 %v477, %v475
    %v568 = vpack.c.b16 %v480, %v478
    %v569 = vpack.c.b16 %v481, %v479
    %v570 = vpack.c.b16 %v484, %v482
    %v571 = vpack.c.b16 %v485, %v483
    %v572 = vpack.c.b16 %v488, %v486
    %v573 = vpack.c.b16 %v489, %v487
    %v574 = vpack.c.b16 %v492, %v490
    %v575 = vpack.c.b16 %v493, %v491
    %v576 = vpack.c.b16 %v496, %v494
    %v577 = vpack.c.b16 %v497, %v495
    %v578 = vpack.c.b16 %v500, %v498
    %v579 = vpack.c.b16 %v501, %v499
    %v580 = vpack.c.b16 %v504, %v502
    %v581 = vpack.c.b16 %v505, %v503
    %v582 = vpack.c.b16 %v508, %v506
    %v583 = vpack.c.b16 %v509, %v507
    %v584 = vpack.c.b16 %v512, %v510
    %v585 = vpack.c.b16 %v513, %v511
    %v586 = vpack.c.b16 %v516, %v514
    %v587 = vpack.c.b16 %v517, %v515
    %v588 = vpack.c.b16 %v520, %v518
    %v589 = vpack.c.b16 %v521, %v519
    %v590 = vpack.c.b16 %v524, %v522
    %v591 = vpack.c.b16 %v525, %v523
    %v592 = vpack.c.b16 %v528, %v526
    %v593 = vpack.c.b16 %v529, %v527
    %658 = vmatpush.bf16.msra.mxu0 %v544
    %659 = vmatpush.bf16.msra.mxu0 %v542
    %660 = vmatpush.bf16.msra.mxu0 %v540
    %661 = vmatpush.bf16.msra.mxu0 %v538
    %662 = vmatpush.bf16.msra.mxu0 %v536
    %663 = vmatpush.bf16.msra.mxu0 %v534
    %664 = vmatpush.bf16.msra.mxu0 %v532
    %665 = vmatpush.bf16.msra.mxu0 %v530
    %666 = vmatmul.bf16.gmra.mxu0 %v264
    %v667 = vpop.f32.mrf.mxu0
    %v668 = vadd.f32 %v334, %v667
    %v669 = vpop.f32.mrf.mxu0
    %670 = vdwg.mxu0
    %671 = vmatpush.bf16.msra.mxu0 %v560
    %672 = vmatpush.bf16.msra.mxu0 %v558
    %673 = vmatpush.bf16.msra.mxu0 %v556
    %674 = vmatpush.bf16.msra.mxu0 %v554
    %675 = vmatpush.bf16.msra.mxu0 %v552
    %676 = vmatpush.bf16.msra.mxu0 %v550
    %677 = vmatpush.bf16.msra.mxu0 %v548
    %678 = vmatpush.bf16.msra.mxu0 %v546
    %679 = vmatmul.bf16.gmra.mxu0 %v265
    %v680 = vpop.f32.mrf.mxu0
    %v681 = vadd.f32 %v668, %v680
    %v682 = vpop.f32.mrf.mxu0
    %683 = vdwg.mxu0
    %684 = vmatpush.bf16.msra.mxu0 %v576
    %685 = vmatpush.bf16.msra.mxu0 %v574
    %686 = vmatpush.bf16.msra.mxu0 %v572
    %687 = vmatpush.bf16.msra.mxu0 %v570
    %688 = vmatpush.bf16.msra.mxu0 %v568
    %689 = vmatpush.bf16.msra.mxu0 %v566
    %690 = vmatpush.bf16.msra.mxu0 %v564
    %691 = vmatpush.bf16.msra.mxu0 %v562
    %692 = vmatmul.bf16.gmra.mxu0 %v266
    %v693 = vpop.f32.mrf.mxu0
    %v694 = vadd.f32 %v681, %v693
    %v695 = vpop.f32.mrf.mxu0
    %696 = vdwg.mxu0
    %697 = vmatpush.bf16.msra.mxu0 %v592
    %698 = vmatpush.bf16.msra.mxu0 %v590
    %699 = vmatpush.bf16.msra.mxu0 %v588
    %700 = vmatpush.bf16.msra.mxu0 %v586
    %701 = vmatpush.bf16.msra.mxu0 %v584
    %702 = vmatpush.bf16.msra.mxu0 %v582
    %703 = vmatpush.bf16.msra.mxu0 %v580
    %704 = vmatpush.bf16.msra.mxu0 %v578
    %705 = vmatmul.bf16.gmra.mxu0 %v267
    %v706 = vpop.f32.mrf.mxu0
    %v707 = vadd.f32 %v694, %v706
    %v708 = vpop.f32.mrf.mxu0
    %709 = vdwg.mxu0
    %710 = vmatpush.bf16.msra.mxu0 %v545
    %711 = vmatpush.bf16.msra.mxu0 %v543
    %712 = vmatpush.bf16.msra.mxu0 %v541
    %713 = vmatpush.bf16.msra.mxu0 %v539
    %714 = vmatpush.bf16.msra.mxu0 %v537
    %715 = vmatpush.bf16.msra.mxu0 %v535
    %716 = vmatpush.bf16.msra.mxu0 %v533
    %717 = vmatpush.bf16.msra.mxu0 %v531
    %718 = vmatmul.bf16.gmra.mxu0 %v264
    %v719 = vpop.f32.mrf.mxu0
    %v720 = vadd.f32 %v335, %v719
    %v721 = vpop.f32.mrf.mxu0
    %722 = vdwg.mxu0
    %723 = vmatpush.bf16.msra.mxu0 %v561
    %724 = vmatpush.bf16.msra.mxu0 %v559
    %725 = vmatpush.bf16.msra.mxu0 %v557
    %726 = vmatpush.bf16.msra.mxu0 %v555
    %727 = vmatpush.bf16.msra.mxu0 %v553
    %728 = vmatpush.bf16.msra.mxu0 %v551
    %729 = vmatpush.bf16.msra.mxu0 %v549
    %730 = vmatpush.bf16.msra.mxu0 %v547
    %731 = vmatmul.bf16.gmra.mxu0 %v265
    %v732 = vpop.f32.mrf.mxu0
    %v733 = vadd.f32 %v720, %v732
    %v734 = vpop.f32.mrf.mxu0
    %735 = vdwg.mxu0
    %736 = vmatpush.bf16.msra.mxu0 %v577
    %737 = vmatpush.bf16.msra.mxu0 %v575
    %738 = vmatpush.bf16.msra.mxu0 %v573
    %739 = vmatpush.bf16.msra.mxu0 %v571
    %740 = vmatpush.bf16.msra.mxu0 %v569
    %741 = vmatpush.bf16.msra.mxu0 %v567
    %742 = vmatpush.bf16.msra.mxu0 %v565
    %743 = vmatpush.bf16.msra.mxu0 %v563
    %744 = vmatmul.bf16.gmra.mxu0 %v266
    %v745 = vpop.f32.mrf.mxu0
    %v746 = vadd.f32 %v733, %v745
    %v747 = vpop.f32.mrf.mxu0
    %748 = vdwg.mxu0
    %749 = vmatpush.bf16.msra.mxu0 %v593
    %750 = vmatpush.bf16.msra.mxu0 %v591
    %751 = vmatpush.bf16.msra.mxu0 %v589
    %752 = vmatpush.bf16.msra.mxu0 %v587
    %753 = vmatpush.bf16.msra.mxu0 %v585
    %754 = vmatpush.bf16.msra.mxu0 %v583
    %755 = vmatpush.bf16.msra.mxu0 %v581
    %756 = vmatpush.bf16.msra.mxu0 %v579
    %757 = vmatmul.bf16.gmra.mxu0 %v267
    %v758 = vpop.f32.mrf.mxu0
    %v759 = vadd.f32 %v746, %v758
    %v760 = vpop.f32.mrf.mxu0
    %761 = vdwg.mxu0
    %v762 = vmax.f32 %v707, 0.0
    %v763 = vmax.f32 %v759, 0.0
    %v764 = vld [vmem:[%s5] sm:$0x3]
    %v766 = vperm.slane %v764, 0
    %v767 = vperm.slane %v764, 1
    %v770 = vmul.f32 %v762, %v766
    %v771 = vmul.f32 %v763, %v767
    %v772 = vadd.f32 %v770, %v771
    %773 = vadd.xlane.f32.xlu0 %v772
    %v774 = vpop.xlane.xlu0 %773
    %s775 = sld [smem:[#allocation2]]
    %v776 = vstv %s775
    %v777 = vadd.f32 %v774, %v776
    %v778 = vsub.f32 0.0, %v777
    %v779 = vmul.f32 %v778, 1.442695
    %v780 = vpow.pop %v779
    %v781 = vadd.f32 %v780, 1.0
    %v782 = vrcp.pop %v781
    %vm783 = vcmask 7168
    %784 = vst.msk [vmem:[%s7] sm:$0xff] %vm783, %v782
    // Predicated region
    $region46: #{discriminator_forward.1} parent=1 // pred_check
      _
    $region47: #{discriminator_forward.1} parent=1 // pred_check_branch
      %786 = sbr.rel (0) target = $region49
    $region48: #{discriminator_forward.1} parent=1 // pred_region
      _
    $region49: #{discriminator_forward.1} parent=1 // pred_fallthru
      _
    // Predicated region
    $region50: #{discriminator_forward.1} parent=1 // pred_check
      _
    $region51: #{discriminator_forward.1} parent=1 // pred_check_branch
      %788 = sbr.rel (0) target = $region53
    $region52: #{discriminator_forward.1} parent=1 // pred_region
      _
    $region53: #{discriminator_forward.1} parent=1 // pred_fallthru
      _
    %789 = vsyncpa [#allocation4], 1
    %790 = vsyncpa [#allocation6], 1
    %791 = vsyncpa [#allocation9], 1

</llo_original>
